<compile_context>
chip_gen: v7x
topology: tpu7x:2x2x1
jax: 0.10.0
libtpu: 0.0.40
codegen_flags: <defaults>
</compile_context>

<pallas_src>
import numpy as np

import jax
import jax.numpy as jnp
from jax.experimental import pallas as pl
from jax.experimental.pallas import tpu as pltpu


# --------------------------- Pallas kernel ---------------------------------
def bottleneck_kernel(x_ref, shift_ref, w1_ref, w2_ref, w3_ref, bias_ref, o_ref):
    wc_mid = w1_ref.shape[1]
    wc_out = o_ref.shape[1]

    x = x_ref[...]                                            # (rows, W*Cin) f32
    x_bf = x.astype(jnp.bfloat16)

    # ---- conv1 (1x1, BN1 scale folded into weights) + bias + ReLU ----
    h1 = jnp.dot(x_bf, w1_ref[...], preferred_element_type=jnp.float32)
    h1 = jnp.maximum(h1 + bias_ref[0:1, 0:wc_mid], 0.0)       # (rows, W*Cmid) f32

    # ---- conv2 (3x3, stride 1, pad 1) + bn2 + ReLU ----
    # Horizontal taps / padding are baked into the banded weights w2_ref[ky].
    # Vertical +-1 shifts (zeroed at each image's top/bottom row) come from
    # 0/1 block-diagonal shift matrices: exact, and they run on the MXU which
    # has plenty of slack here, instead of materializing shifted copies.
    h1_bf = h1.astype(jnp.bfloat16)
    up = jnp.dot(shift_ref[0], h1_bf,
                 preferred_element_type=jnp.float32).astype(jnp.bfloat16)
    dn = jnp.dot(shift_ref[1], h1_bf,
                 preferred_element_type=jnp.float32).astype(jnp.bfloat16)

    h2 = (jnp.dot(up, w2_ref[0], preferred_element_type=jnp.float32)
          + jnp.dot(h1_bf, w2_ref[1], preferred_element_type=jnp.float32)
          + jnp.dot(dn, w2_ref[2], preferred_element_type=jnp.float32))
    h2 = jnp.maximum(h2 + bias_ref[1:2, 0:wc_mid], 0.0)       # (rows, W*Cmid) f32

    # ---- conv3 (1x1, BN3 scale folded) + bias + residual add + ReLU ----
    h3 = jnp.dot(h2.astype(jnp.bfloat16), w3_ref[...],
                 preferred_element_type=jnp.float32)
    h3 = h3 + bias_ref[2:3, 0:wc_out]
    o_ref[...] = jnp.maximum(h3 + x, 0.0).astype(o_ref.dtype)  # (rows, W*Cout)


# --------------------------- weight preparation -----------------------------
def _fuse_bn_np(gamma, beta, mean, var, eps=1e-5):
    gamma = np.asarray(gamma, np.float32)
    beta = np.asarray(beta, np.float32)
    mean = np.asarray(mean, np.float32)
    var = np.asarray(var, np.float32)
    scale = gamma / np.sqrt(var + eps)
    bias = beta - mean * scale
    return scale, bias


def _prepare_weights(params, w_img, eps=1e-5):
    """Lane-dense block-diagonal / banded bf16 weights with BN scale folded in."""
    w1 = np.asarray(params["w1"], np.float32)      # (Cmid, Cin, 1, 1)
    w2 = np.asarray(params["w2"], np.float32)      # (Cmid, Cmid, 3, 3)
    w3 = np.asarray(params["w3"], np.float32)      # (Cout, Cmid, 1, 1)
    c_mid, c_in = w1.shape[0], w1.shape[1]
    c_out = w3.shape[0]

    s1, b1 = _fuse_bn_np(params["g1"], params["be1"], params["m1"], params["v1"], eps)
    s2, b2 = _fuse_bn_np(params["g2"], params["be2"], params["m2"], params["v2"], eps)
    s3, b3 = _fuse_bn_np(params["g3"], params["be3"], params["m3"], params["v3"], eps)

    # Zero-pad hidden channels so W*Cmid_pad is a multiple of 128 (lane-dense
    # hidden stage, full MXU N). Padded channels stay exactly zero end-to-end.
    step = 128 // int(np.gcd(w_img, 128))
    c_mid_pad = int(np.ceil(c_mid / step) * step)

    eye_w = np.eye(w_img, dtype=np.float32)

    # conv1: (Cin, Cmid_pad), BN1 scale folded, zero-padded output channels.
    w1m = np.zeros((c_in, c_mid_pad), np.float32)
    w1m[:, :c_mid] = w1[:, :, 0, 0].T * s1[None, :]
    w1_big = np.kron(eye_w, w1m)                               # (W*Cin,  W*Cmid_pad)

    # conv3: (Cmid_pad, Cout), BN3 scale folded, zero-padded input channels.
    w3m = np.zeros((c_mid_pad, c_out), np.float32)
    w3m[:c_mid, :] = w3[:, :, 0, 0].T * s3[None, :]
    w3_big = np.kron(eye_w, w3m)                               # (W*Cmid_pad, W*Cout)

    # conv2: one banded matrix per vertical tap (horizontal pad folded in).
    wc_mid = w_img * c_mid_pad
    w2_big = np.zeros((3, wc_mid, wc_mid), np.float32)
    for ky in range(3):
        for kx in range(3):
            tap = np.zeros((c_mid_pad, c_mid_pad), np.float32)
            tap[:c_mid, :c_mid] = w2[:, :, ky, kx].T * s2[None, :]
            # shift[w_in, w_out] = 1 iff w_in = w_out + kx - 1 (h-pad folded in)
            shift = np.eye(w_img, k=1 - kx, dtype=np.float32)
            w2_big[ky] += np.kron(shift, tap)

    # Packed BN biases (row0=bn1, row1=bn2, row2=bn3); padded channels get 0.
    wc_out = w_img * c_out
    bias_w = max(wc_mid, wc_out)
    bias = np.zeros((3, bias_w), np.float32)
    b1p = np.zeros((c_mid_pad,), np.float32); b1p[:c_mid] = b1
    b2p = np.zeros((c_mid_pad,), np.float32); b2p[:c_mid] = b2
    bias[0, :wc_mid] = np.tile(b1p, w_img)
    bias[1, :wc_mid] = np.tile(b2p, w_img)
    bias[2, :wc_out] = np.tile(b3, w_img)

    return (jnp.asarray(w1_big, jnp.bfloat16),
            jnp.asarray(w2_big, jnp.bfloat16),
            jnp.asarray(w3_big, jnp.bfloat16),
            jnp.asarray(bias, jnp.float32),
            c_mid_pad, c_out)


# --------------------------- forward wrapper --------------------------------
def bottleneck_forward(x_nchw, params, *, eps=1e-5):
    """Pallas implementation of Bottleneck.forward (stride=1, downsample=None)."""
    n, c_in, h, w = x_nchw.shape
    w1_big, w2_big, w3_big, bias, c_mid_pad, c_out = _prepare_weights(params, w, eps)
    assert c_out == c_in, "downsample=None requires inplanes == planes * expansion"

    wc_in = w * c_in
    wc_mid = w * c_mid_pad
    wc_out = w * c_out

    # Several images per grid step: raises matmul M toward the MXU row count
    # and amortizes the per-grid-step overhead.
    max_rows = 256
    b_tile = 1
    for cand in range(min(n, max(1, max_rows // h)), 0, -1):
        if n % cand == 0:
            b_tile = cand
            break
    if (b_tile * h) % 8 != 0:          # keep the block sublane-aligned
        b_tile = n
    rows = b_tile * h
    n_steps = n // b_tile

    # Vertical +-1 row-shift matrices, block-diagonal per image (zero rows at
    # each image's top/bottom => the 3x3 conv's vertical zero padding).
    s_up = np.kron(np.eye(b_tile, dtype=np.float32), np.eye(h, k=-1, dtype=np.float32))
    s_dn = np.kron(np.eye(b_tile, dtype=np.float32), np.eye(h, k=1, dtype=np.float32))
    shifts = jnp.asarray(np.stack([s_up, s_dn]), jnp.bfloat16)   # (2, rows, rows)

    # NCHW -> (N*H, W*C) lane-dense layout.
    # TODO(synk): in a full HRNet keep activations in this layout across blocks
    #             to avoid the wrapper-side transposes entirely.
    x_2d = jnp.transpose(x_nchw, (0, 2, 3, 1)).reshape(n * h, wc_in).astype(jnp.float32)

    grid_spec = pltpu.PrefetchScalarGridSpec(
        num_scalar_prefetch=0,
        grid=(n_steps,),
        in_specs=[
            pl.BlockSpec((rows, wc_in), lambda i: (i, 0)),          # x (b_tile images)
            pl.BlockSpec((2, rows, rows), lambda i: (0, 0, 0)),     # vertical shifts
            pl.BlockSpec((wc_in, wc_mid), lambda i: (0, 0)),        # conv1 block-diag
            pl.BlockSpec((3, wc_mid, wc_mid), lambda i: (0, 0, 0)), # conv2 banded taps
            pl.BlockSpec((wc_mid, wc_out), lambda i: (0, 0)),       # conv3 block-diag
            pl.BlockSpec((3, bias.shape[1]), lambda i: (0, 0)),     # packed BN biases
        ],
        out_specs=pl.BlockSpec((rows, wc_out), lambda i: (i, 0)),
    )

    out_2d = pl.pallas_call(
        bottleneck_kernel,
        out_shape=jax.ShapeDtypeStruct((n * h, wc_out), jnp.float32),
        grid_spec=grid_spec,
        compiler_params=pltpu.CompilerParams(dimension_semantics=("parallel",)),
    )(x_2d, shifts, w1_big, w2_big, w3_big, bias)

    # (N*H, W*Cout) -> NCHW
    return jnp.transpose(out_2d.reshape(n, h, w, c_out), (0, 3, 1, 2))


# ----------------------- pure-JAX reference (for checking) ------------------
def bottleneck_reference(x, p, eps=1e-5):
    def conv(x, w, pad):
        return jax.lax.conv_general_dilated(
            x, w, (1, 1), [(pad, pad), (pad, pad)],
            dimension_numbers=("NCHW", "OIHW", "NCHW"))

    def bn(x, g, b, m, v):
        s = g / jnp.sqrt(v + eps)
        return x * s[None, :, None, None] + (b - m * s)[None, :, None, None]

    out = jax.nn.relu(bn(conv(x, p["w1"], 0), p["g1"], p["be1"], p["m1"], p["v1"]))
    out = jax.nn.relu(bn(conv(out, p["w2"], 1), p["g2"], p["be2"], p["m2"], p["v2"]))
    out = bn(conv(out, p["w3"], 0), p["g3"], p["be3"], p["m3"], p["v3"])
    return jax.nn.relu(out + x)


if __name__ == "__main__":
    # Module config: Bottleneck(inplanes=16, planes=4, stride=1, downsample=None)
    inplanes, planes, expansion = 16, 4, 4
    c_out = planes * expansion
    N, H, W = 2, 16, 16

    key = jax.random.PRNGKey(0)
    ks = jax.random.split(key, 16)

    params = {
        "w1": 0.2 * jax.random.normal(ks[0], (planes, inplanes, 1, 1), jnp.float32),
        "w2": 0.2 * jax.random.normal(ks[1], (planes, planes, 3, 3), jnp.float32),
        "w3": 0.2 * jax.random.normal(ks[2], (c_out, planes, 1, 1), jnp.float32),
        "g1": 1.0 + 0.1 * jax.random.normal(ks[3], (planes,), jnp.float32),
        "be1": 0.1 * jax.random.normal(ks[4], (planes,), jnp.float32),
        "m1": 0.1 * jax.random.normal(ks[5], (planes,), jnp.float32),
        "v1": jax.random.uniform(ks[6], (planes,), jnp.float32, 0.5, 1.5),
        "g2": 1.0 + 0.1 * jax.random.normal(ks[7], (planes,), jnp.float32),
        "be2": 0.1 * jax.random.normal(ks[8], (planes,), jnp.float32),
        "m2": 0.1 * jax.random.normal(ks[9], (planes,), jnp.float32),
        "v2": jax.random.uniform(ks[10], (planes,), jnp.float32, 0.5, 1.5),
        "g3": 1.0 + 0.1 * jax.random.normal(ks[11], (c_out,), jnp.float32),
        "be3": 0.1 * jax.random.normal(ks[12], (c_out,), jnp.float32),
        "m3": 0.1 * jax.random.normal(ks[13], (c_out,), jnp.float32),
        "v3": jax.random.uniform(ks[14], (c_out,), jnp.float32, 0.5, 1.5),
    }

    x = jax.random.normal(ks[15], (N, inplanes, H, W), jnp.float32)

    out = jax.block_until_ready(bottleneck_forward(x, params))
    ref = jax.block_until_ready(bottleneck_reference(x, params))
    assert out.shape == ref.shape == (N, c_out, H, W)

    # bf16 MXU inputs vs f32 reference: allow a slightly looser tolerance.
    if not np.allclose(np.asarray(out), np.asarray(ref), atol=5e-2, rtol=5e-2):
        err = float(np.max(np.abs(np.asarray(out) - np.asarray(ref))))
        raise AssertionError(f"Pallas kernel mismatch vs reference, max abs err = {err}")

    print("KERNEL_OK")
</pallas_src>

<mosaic_0001>
module attributes {stable_mosaic.version = 11 : i64} {
  func.func @bottleneck_kernel(%arg0: i32, %arg1: memref<32x256xf32, #tpu.memory_space<vmem>>, %arg2: memref<2x32x32xbf16, #tpu.memory_space<vmem>>, %arg3: memref<256x128xbf16, #tpu.memory_space<vmem>>, %arg4: memref<3x128x128xbf16, #tpu.memory_space<vmem>>, %arg5: memref<128x256xbf16, #tpu.memory_space<vmem>>, %arg6: memref<3x256xf32, #tpu.memory_space<vmem>>, %arg7: memref<32x256xf32, #tpu.memory_space<vmem>>) attributes {dimension_semantics = [#tpu.dimension_semantics<parallel>], iteration_bounds = array<i64: 1>, scalar_prefetch = 0 : i64, scratch_operands = 0 : i64, tpu.core_type = #tpu.core_type<tc>, window_params = [{transform_indices = @transform_0, window_bounds = array<i64: 32, 256>}, {pipeline_mode = #tpu.pipeline_mode<synchronous>, transform_indices = @transform_1, window_bounds = array<i64: 2, 32, 32>}, {pipeline_mode = #tpu.pipeline_mode<synchronous>, transform_indices = @transform_2, window_bounds = array<i64: 256, 128>}, {pipeline_mode = #tpu.pipeline_mode<synchronous>, transform_indices = @transform_3, window_bounds = array<i64: 3, 128, 128>}, {pipeline_mode = #tpu.pipeline_mode<synchronous>, transform_indices = @transform_4, window_bounds = array<i64: 128, 256>}, {pipeline_mode = #tpu.pipeline_mode<synchronous>, transform_indices = @transform_5, window_bounds = array<i64: 3, 256>}, {transform_indices = @transform_6, window_bounds = array<i64: 32, 256>}]} {
    %c0 = arith.constant 0 : index
    %c0_0 = arith.constant 0 : index
    %0 = vector.load %arg1[%c0, %c0_0] : memref<32x256xf32, #tpu.memory_space<vmem>>, vector<32x256xf32>
    %1 = arith.truncf %0 : vector<32x256xf32> to vector<32x256xbf16>
    %c0_1 = arith.constant 0 : index
    %c0_2 = arith.constant 0 : index
    %2 = vector.load %arg3[%c0_1, %c0_2] : memref<256x128xbf16, #tpu.memory_space<vmem>>, vector<256x128xbf16>
    %cst = arith.constant dense<0.000000e+00> : vector<32x128xf32>
    %3 = tpu.matmul %1, %2, %cst {dimension_numbers = #tpu.dot_dimension_numbers<[1], [0], [0], [1], [0, 0, 1, 1], [], []>} : vector<32x256xbf16>, vector<256x128xbf16>, vector<32x128xf32> -> vector<32x128xf32>
    %c0_3 = arith.constant 0 : index
    %c0_4 = arith.constant 0 : index
    %4 = vector.load %arg6[%c0_3, %c0_4] : memref<3x256xf32, #tpu.memory_space<vmem>>, vector<1x128xf32>
    %5 = vector.broadcast %4 : vector<1x128xf32> to vector<32x128xf32>
    %6 = arith.addf %3, %5 : vector<32x128xf32>
    %cst_5 = arith.constant 0.000000e+00 : f32
    %7 = vector.broadcast %cst_5 : f32 to vector<32x128xf32>
    %8 = arith.maximumf %6, %7 : vector<32x128xf32>
    %9 = arith.truncf %8 : vector<32x128xf32> to vector<32x128xbf16>
    %c0_6 = arith.constant 0 : index
    %c0_7 = arith.constant 0 : index
    %c0_8 = arith.constant 0 : index
    %10 = vector.load %arg2[%c0_6, %c0_7, %c0_8] : memref<2x32x32xbf16, #tpu.memory_space<vmem>>, vector<1x32x32xbf16>
    %11 = vector.shape_cast %10 : vector<1x32x32xbf16> to vector<32x32xbf16>
    %cst_9 = arith.constant dense<0.000000e+00> : vector<32x128xf32>
    %12 = tpu.matmul %11, %9, %cst_9 {dimension_numbers = #tpu.dot_dimension_numbers<[1], [0], [0], [1], [0, 0, 1, 1], [], []>} : vector<32x32xbf16>, vector<32x128xbf16>, vector<32x128xf32> -> vector<32x128xf32>
    %13 = arith.truncf %12 : vector<32x128xf32> to vector<32x128xbf16>
    %c1 = arith.constant 1 : index
    %c0_10 = arith.constant 0 : index
    %c0_11 = arith.constant 0 : index
    %14 = vector.load %arg2[%c1, %c0_10, %c0_11] : memref<2x32x32xbf16, #tpu.memory_space<vmem>>, vector<1x32x32xbf16>
    %15 = vector.shape_cast %14 : vector<1x32x32xbf16> to vector<32x32xbf16>
    %cst_12 = arith.constant dense<0.000000e+00> : vector<32x128xf32>
    %16 = tpu.matmul %15, %9, %cst_12 {dimension_numbers = #tpu.dot_dimension_numbers<[1], [0], [0], [1], [0, 0, 1, 1], [], []>} : vector<32x32xbf16>, vector<32x128xbf16>, vector<32x128xf32> -> vector<32x128xf32>
    %17 = arith.truncf %16 : vector<32x128xf32> to vector<32x128xbf16>
    %c0_13 = arith.constant 0 : index
    %c0_14 = arith.constant 0 : index
    %c0_15 = arith.constant 0 : index
    %18 = vector.load %arg4[%c0_13, %c0_14, %c0_15] : memref<3x128x128xbf16, #tpu.memory_space<vmem>>, vector<1x128x128xbf16>
    %19 = vector.shape_cast %18 : vector<1x128x128xbf16> to vector<128x128xbf16>
    %cst_16 = arith.constant dense<0.000000e+00> : vector<32x128xf32>
    %20 = tpu.matmul %13, %19, %cst_16 {dimension_numbers = #tpu.dot_dimension_numbers<[1], [0], [0], [1], [0, 0, 1, 1], [], []>} : vector<32x128xbf16>, vector<128x128xbf16>, vector<32x128xf32> -> vector<32x128xf32>
    %c1_17 = arith.constant 1 : index
    %c0_18 = arith.constant 0 : index
    %c0_19 = arith.constant 0 : index
    %21 = vector.load %arg4[%c1_17, %c0_18, %c0_19] : memref<3x128x128xbf16, #tpu.memory_space<vmem>>, vector<1x128x128xbf16>
    %22 = vector.shape_cast %21 : vector<1x128x128xbf16> to vector<128x128xbf16>
    %cst_20 = arith.constant dense<0.000000e+00> : vector<32x128xf32>
    %23 = tpu.matmul %9, %22, %cst_20 {dimension_numbers = #tpu.dot_dimension_numbers<[1], [0], [0], [1], [0, 0, 1, 1], [], []>} : vector<32x128xbf16>, vector<128x128xbf16>, vector<32x128xf32> -> vector<32x128xf32>
    %24 = arith.addf %20, %23 : vector<32x128xf32>
    %c2 = arith.constant 2 : index
    %c0_21 = arith.constant 0 : index
    %c0_22 = arith.constant 0 : index
    %25 = vector.load %arg4[%c2, %c0_21, %c0_22] : memref<3x128x128xbf16, #tpu.memory_space<vmem>>, vector<1x128x128xbf16>
    %26 = vector.shape_cast %25 : vector<1x128x128xbf16> to vector<128x128xbf16>
    %cst_23 = arith.constant dense<0.000000e+00> : vector<32x128xf32>
    %27 = tpu.matmul %17, %26, %cst_23 {dimension_numbers = #tpu.dot_dimension_numbers<[1], [0], [0], [1], [0, 0, 1, 1], [], []>} : vector<32x128xbf16>, vector<128x128xbf16>, vector<32x128xf32> -> vector<32x128xf32>
    %28 = arith.addf %24, %27 : vector<32x128xf32>
    %c1_24 = arith.constant 1 : index
    %c0_25 = arith.constant 0 : index
    %29 = vector.load %arg6[%c1_24, %c0_25] : memref<3x256xf32, #tpu.memory_space<vmem>>, vector<1x128xf32>
    %30 = vector.broadcast %29 : vector<1x128xf32> to vector<32x128xf32>
    %31 = arith.addf %28, %30 : vector<32x128xf32>
    %cst_26 = arith.constant 0.000000e+00 : f32
    %32 = vector.broadcast %cst_26 : f32 to vector<32x128xf32>
    %33 = arith.maximumf %31, %32 : vector<32x128xf32>
    %34 = arith.truncf %33 : vector<32x128xf32> to vector<32x128xbf16>
    %c0_27 = arith.constant 0 : index
    %c0_28 = arith.constant 0 : index
    %35 = vector.load %arg5[%c0_27, %c0_28] : memref<128x256xbf16, #tpu.memory_space<vmem>>, vector<128x256xbf16>
    %cst_29 = arith.constant dense<0.000000e+00> : vector<32x256xf32>
    %36 = tpu.matmul %34, %35, %cst_29 {dimension_numbers = #tpu.dot_dimension_numbers<[1], [0], [0], [1], [0, 0, 1, 1], [], []>} : vector<32x128xbf16>, vector<128x256xbf16>, vector<32x256xf32> -> vector<32x256xf32>
    %c2_30 = arith.constant 2 : index
    %c0_31 = arith.constant 0 : index
    %37 = vector.load %arg6[%c2_30, %c0_31] : memref<3x256xf32, #tpu.memory_space<vmem>>, vector<1x256xf32>
    %38 = vector.broadcast %37 : vector<1x256xf32> to vector<32x256xf32>
    %39 = arith.addf %36, %38 : vector<32x256xf32>
    %40 = arith.addf %39, %0 : vector<32x256xf32>
    %cst_32 = arith.constant 0.000000e+00 : f32
    %41 = vector.broadcast %cst_32 : f32 to vector<32x256xf32>
    %42 = arith.maximumf %40, %41 : vector<32x256xf32>
    %c0_33 = arith.constant 0 : index
    %c0_34 = arith.constant 0 : index
    %43 = vector.load %arg7[%c0_33, %c0_34] : memref<32x256xf32, #tpu.memory_space<vmem>>, vector<32x256xf32>
    tpu.vector_store %arg7[%c0_33, %c0_34], %42 {strides = array<i32>} : memref<32x256xf32, #tpu.memory_space<vmem>>, vector<32x256xf32>,
    return
  }
  func.func @transform_0(%arg0: i32) -> (i32, i32) {
    %c0_i32 = arith.constant 0 : i32
    %c0_i32_0 = arith.constant 0 : i32
    return %arg0, %c0_i32 : i32, i32
  }
  func.func @transform_1(%arg0: i32) -> (i32, i32, i32) {
    %c0_i32 = arith.constant 0 : i32
    %c0_i32_0 = arith.constant 0 : i32
    %c0_i32_1 = arith.constant 0 : i32
    %c0_i32_2 = arith.constant 0 : i32
    return %c0_i32, %c0_i32_0, %c0_i32_1 : i32, i32, i32
  }
  func.func @transform_2(%arg0: i32) -> (i32, i32) {
    %c0_i32 = arith.constant 0 : i32
    %c0_i32_0 = arith.constant 0 : i32
    %c0_i32_1 = arith.constant 0 : i32
    return %c0_i32, %c0_i32_0 : i32, i32
  }
  func.func @transform_3(%arg0: i32) -> (i32, i32, i32) {
    %c0_i32 = arith.constant 0 : i32
    %c0_i32_0 = arith.constant 0 : i32
    %c0_i32_1 = arith.constant 0 : i32
    %c0_i32_2 = arith.constant 0 : i32
    return %c0_i32, %c0_i32_0, %c0_i32_1 : i32, i32, i32
  }
  func.func @transform_4(%arg0: i32) -> (i32, i32) {
    %c0_i32 = arith.constant 0 : i32
    %c0_i32_0 = arith.constant 0 : i32
    %c0_i32_1 = arith.constant 0 : i32
    return %c0_i32, %c0_i32_0 : i32, i32
  }
  func.func @transform_5(%arg0: i32) -> (i32, i32) {
    %c0_i32 = arith.constant 0 : i32
    %c0_i32_0 = arith.constant 0 : i32
    %c0_i32_1 = arith.constant 0 : i32
    return %c0_i32, %c0_i32_0 : i32, i32
  }
  func.func @transform_6(%arg0: i32) -> (i32, i32) {
    %c0_i32 = arith.constant 0 : i32
    %c0_i32_0 = arith.constant 0 : i32
    return %arg0, %c0_i32 : i32, i32
  }
}

</mosaic_0001>

<llo_original>
// kernel: tpu_custom_call.1
$region0: #{tpu_custom_call.1}
  #allocation0 [shape = 'u32[]', space=smem, size = 0x4, offset = 0x4, fixed_abs, tag = 'smem constant byte address 0x4 - core index']
  #allocation1 [shape = 'u32[144,128]{1,0:T(1,128)}', space=vmem, size = 0x12000, scoped, tag = 'internal scratch']
  %s0 = inlined_call_operand.hbm [shape: f32[32,256], index: 0, kind: input, shape index: {}]
  %s1 = inlined_call_operand.hbm [shape: bf16[2,32,32], index: 1, kind: input, shape index: {}]
  %s2 = inlined_call_operand.hbm [shape: bf16[256,128], index: 2, kind: input, shape index: {}]
  %s3 = inlined_call_operand.hbm [shape: bf16[3,128,128], index: 3, kind: input, shape index: {}]
  %s4 = inlined_call_operand.hbm [shape: bf16[128,256], index: 4, kind: input, shape index: {}]
  %s5 = inlined_call_operand.vmem [shape: f32[3,256], index: 5, kind: input, shape index: {}]
  %s6 = inlined_call_operand.hbm [shape: f32[32,256], index: 6, kind: output, shape index: {}]
  %s7 = sld [smem:[#allocation0]]
  $region54: #{tpu_custom_call.1} parent=0
    _
  %s9 = ssub.s32 1, %s7
  %s10 = scalar_select 0, %s9, %s7
  $region1: #{tpu_custom_call.1} parent=0
    #allocation2 [shape = 'u8[32768]{0}', space=vmem, size = 0x8000, scoped, tag = 'input window, operand 0, single buffered']
    #allocation3 [shape = 's32[1]{0}', space=sflag, size = 0x4, scoped, tag = 'scoped memory for tpu_custom_call.1']
    #allocation4 [shape = 's32[1]{0}', space=sflag, size = 0x4, scoped, tag = 'scoped memory for tpu_custom_call.1']
    #allocation5 [shape = 'u8[16384]{0}', space=vmem, size = 0x4000, scoped, tag = 'input window, operand 1, single buffered']
    #allocation6 [shape = 's32[1]{0}', space=sflag, size = 0x4, scoped, tag = 'scoped memory for tpu_custom_call.1']
    #allocation7 [shape = 'u8[65536]{0}', space=vmem, size = 0x10000, scoped, tag = 'input window, operand 2, single buffered']
    #allocation8 [shape = 'u8[98304]{0}', space=vmem, size = 0x18000, scoped, tag = 'input window, operand 3, single buffered']
    #allocation9 [shape = 's32[1]{0}', space=sflag, size = 0x4, scoped, tag = 'scoped memory for tpu_custom_call.1']
    #allocation10 [shape = 'u8[65536]{0}', space=vmem, size = 0x10000, scoped, tag = 'input window, operand 4, single buffered']
    #allocation11 [shape = 'u8[32768]{0}', space=vmem, size = 0x8000, scoped, tag = 'output window, operand 0, single buffered']
    %11 = vsyncpa [#allocation3], 0
    %12 = vsyncpa [#allocation6], 0
    %13 = vsyncpa [#allocation9], 0
    %14 = vsyncpa [#allocation4], 0
    // Predicated region
    $region2: #{tpu_custom_call.1} parent=1 // pred_check
      _
    $region3: #{tpu_custom_call.1} parent=1 // pred_check_branch
      %16 = sbr.rel (0) target = $region5
    $region4: #{tpu_custom_call.1} parent=1 // pred_region
      %s18 = ssub.s32 1024, 1024
      %19 = vsyncadd [#allocation3], %s18
      %s20 = sshll.u32 [#allocation2], 4
      %s21 = int_to_ptr.vmem [resolvable:$true] %s20
      %26 = dma.hbm_to_vmem [thread:$0]  %s0, 1024, %s21, [#allocation3], 256, 256, 16
    $region5: #{tpu_custom_call.1} parent=1 // pred_fallthru
      _
    // Predicated region
    $region6: #{tpu_custom_call.1} parent=1 // pred_check
      _
    $region7: #{tpu_custom_call.1} parent=1 // pred_check_branch
      %28 = sbr.rel (0) target = $region9
    $region8: #{tpu_custom_call.1} parent=1 // pred_region
      %s30 = ssub.s32 512, 512
      %31 = vsyncadd [#allocation6], %s30
      %s32 = sshll.u32 [#allocation5], 4
      %s33 = int_to_ptr.vmem [resolvable:$true] %s32
      %38 = dma.hbm_to_vmem [thread:$0]  %s1, 512, %s33, [#allocation6], 64, 64, 4
    $region9: #{tpu_custom_call.1} parent=1 // pred_fallthru
      _
    // Predicated region
    $region10: #{tpu_custom_call.1} parent=1 // pred_check
      _
    $region11: #{tpu_custom_call.1} parent=1 // pred_check_branch
      %40 = sbr.rel (0) target = $region13
    $region12: #{tpu_custom_call.1} parent=1 // pred_region
      %s42 = ssub.s32 2048, 2048
      %43 = vsyncadd [#allocation6], %s42
      %s44 = sshll.u32 [#allocation7], 4
      %s45 = int_to_ptr.vmem [resolvable:$true] %s44
      %50 = dma.hbm_to_vmem [thread:$0]  %s2, 2048, %s45, [#allocation6], 64, 64, 4
    $region13: #{tpu_custom_call.1} parent=1 // pred_fallthru
      _
    // Predicated region
    $region14: #{tpu_custom_call.1} parent=1 // pred_check
      _
    $region15: #{tpu_custom_call.1} parent=1 // pred_check_branch
      %52 = sbr.rel (0) target = $region17
    $region16: #{tpu_custom_call.1} parent=1 // pred_region
      %s54 = ssub.s32 3072, 3072
      %55 = vsyncadd [#allocation9], %s54
      %s56 = sshll.u32 [#allocation8], 4
      %s57 = int_to_ptr.vmem [resolvable:$true] %s56
      %62 = dma.hbm_to_vmem [thread:$0]  %s3, 3072, %s57, [#allocation9], 64, 64, 4
    $region17: #{tpu_custom_call.1} parent=1 // pred_fallthru
      _
    // Predicated region
    $region18: #{tpu_custom_call.1} parent=1 // pred_check
      _
    $region19: #{tpu_custom_call.1} parent=1 // pred_check_branch
      %64 = sbr.rel (0) target = $region21
    $region20: #{tpu_custom_call.1} parent=1 // pred_region
      %s66 = ssub.s32 2048, 2048
      %67 = vsyncadd [#allocation9], %s66
      %s68 = sshll.u32 [#allocation10], 4
      %s69 = int_to_ptr.vmem [resolvable:$true] %s68
      %74 = dma.hbm_to_vmem [thread:$0]  %s4, 2048, %s69, [#allocation9], 128, 128, 8
    $region21: #{tpu_custom_call.1} parent=1 // pred_fallthru
      _
    // Predicated region
    $region22: #{tpu_custom_call.1} parent=1 // pred_check
      _
    $region23: #{tpu_custom_call.1} parent=1 // pred_check_branch
      %76 = sbr.rel (0) target = $region25
    $region24: #{tpu_custom_call.1} parent=1 // pred_region
      _
    $region25: #{tpu_custom_call.1} parent=1 // pred_fallthru
      _
    // Predicated region
    $region26: #{tpu_custom_call.1} parent=1 // pred_check
      _
    $region27: #{tpu_custom_call.1} parent=1 // pred_check_branch
      %78 = sbr.rel (0) target = $region29
    $region28: #{tpu_custom_call.1} parent=1 // pred_region
      %79 = dma.done [#allocation3], 1024
    $region29: #{tpu_custom_call.1} parent=1 // pred_fallthru
      _
    // Predicated region
    $region30: #{tpu_custom_call.1} parent=1 // pred_check
      _
    $region31: #{tpu_custom_call.1} parent=1 // pred_check_branch
      %81 = sbr.rel (0) target = $region33
    $region32: #{tpu_custom_call.1} parent=1 // pred_region
      %82 = dma.done [#allocation6], 512
    $region33: #{tpu_custom_call.1} parent=1 // pred_fallthru
      _
    // Predicated region
    $region34: #{tpu_custom_call.1} parent=1 // pred_check
      _
    $region35: #{tpu_custom_call.1} parent=1 // pred_check_branch
      %84 = sbr.rel (0) target = $region37
    $region36: #{tpu_custom_call.1} parent=1 // pred_region
      %85 = dma.done [#allocation6], 2048
    $region37: #{tpu_custom_call.1} parent=1 // pred_fallthru
      _
    // Predicated region
    $region38: #{tpu_custom_call.1} parent=1 // pred_check
      _
    $region39: #{tpu_custom_call.1} parent=1 // pred_check_branch
      %87 = sbr.rel (0) target = $region41
    $region40: #{tpu_custom_call.1} parent=1 // pred_region
      %88 = dma.done [#allocation9], 3072
    $region41: #{tpu_custom_call.1} parent=1 // pred_fallthru
      _
    // Predicated region
    $region42: #{tpu_custom_call.1} parent=1 // pred_check
      _
    $region43: #{tpu_custom_call.1} parent=1 // pred_check_branch
      %90 = sbr.rel (0) target = $region45
    $region44: #{tpu_custom_call.1} parent=1 // pred_region
      %91 = dma.done [#allocation9], 2048
    $region45: #{tpu_custom_call.1} parent=1 // pred_fallthru
      _
    %v93 = vld [vmem:[#allocation2] sm:$0xff]
    %v94 = vld [vmem:[#allocation2 + $0x8] sm:$0xff]
    %v95 = vld [vmem:[#allocation2 + $0x10] sm:$0xff]
    %v96 = vld [vmem:[#allocation2 + $0x18] sm:$0xff]
    %v97 = vld [vmem:[#allocation2 + $0x20] sm:$0xff]
    %v98 = vld [vmem:[#allocation2 + $0x28] sm:$0xff]
    %v99 = vld [vmem:[#allocation2 + $0x30] sm:$0xff]
    %v100 = vld [vmem:[#allocation2 + $0x38] sm:$0xff]
    %v101 = vpack.c.bf16 %v95, %v93
    %v102 = vpack.c.bf16 %v96, %v94
    %v103 = vpack.c.bf16 %v99, %v97
    %v104 = vpack.c.bf16 %v100, %v98
    %v105 = vld [vmem:[#allocation7] sm:$0xf]
    %v106 = vld [vmem:[#allocation7 + $0x4] sm:$0xf]
    %v107 = vld [vmem:[#allocation7 + $0x8] sm:$0xf]
    %v108 = vld [vmem:[#allocation7 + $0xc] sm:$0xf]
    %v109 = vld [vmem:[#allocation7 + $0x10] sm:$0xf]
    %v110 = vld [vmem:[#allocation7 + $0x14] sm:$0xf]
    %v111 = vld [vmem:[#allocation7 + $0x18] sm:$0xf]
    %v112 = vld [vmem:[#allocation7 + $0x1c] sm:$0xf]
    %v113 = vld [vmem:[#allocation7 + $0x20] sm:$0xf]
    %v114 = vld [vmem:[#allocation7 + $0x24] sm:$0xf]
    %v115 = vld [vmem:[#allocation7 + $0x28] sm:$0xf]
    %v116 = vld [vmem:[#allocation7 + $0x2c] sm:$0xf]
    %v117 = vld [vmem:[#allocation7 + $0x30] sm:$0xf]
    %v118 = vld [vmem:[#allocation7 + $0x34] sm:$0xf]
    %v119 = vld [vmem:[#allocation7 + $0x38] sm:$0xf]
    %v120 = vld [vmem:[#allocation7 + $0x3c] sm:$0xf]
    %v121 = vld [vmem:[#allocation7 + $0x40] sm:$0xf]
    %v122 = vld [vmem:[#allocation7 + $0x44] sm:$0xf]
    %v123 = vld [vmem:[#allocation7 + $0x48] sm:$0xf]
    %v124 = vld [vmem:[#allocation7 + $0x4c] sm:$0xf]
    %v125 = vld [vmem:[#allocation7 + $0x50] sm:$0xf]
    %v126 = vld [vmem:[#allocation7 + $0x54] sm:$0xf]
    %v127 = vld [vmem:[#allocation7 + $0x58] sm:$0xf]
    %v128 = vld [vmem:[#allocation7 + $0x5c] sm:$0xf]
    %v129 = vld [vmem:[#allocation7 + $0x60] sm:$0xf]
    %v130 = vld [vmem:[#allocation7 + $0x64] sm:$0xf]
    %v131 = vld [vmem:[#allocation7 + $0x68] sm:$0xf]
    %v132 = vld [vmem:[#allocation7 + $0x6c] sm:$0xf]
    %v133 = vld [vmem:[#allocation7 + $0x70] sm:$0xf]
    %v134 = vld [vmem:[#allocation7 + $0x74] sm:$0xf]
    %v135 = vld [vmem:[#allocation7 + $0x78] sm:$0xf]
    %v136 = vld [vmem:[#allocation7 + $0x7c] sm:$0xf]
    %v137 = vld [vmem:[%s5] sm:$0x1]
    %v138 = vlaneseq
    %v139 = vshrl.u32 %v138, 7
    %v140 = vsub.s32 0, %v139
    %v141 = vrot.slane %v137, %v140
    %v174 = vunpack.c.l.b16 %v105
    %v175 = vunpack.c.l.b16 %v106
    %v176 = vunpack.c.l.b16 %v107
    %v177 = vunpack.c.l.b16 %v108
    %v178 = vunpack.c.l.b16 %v109
    %v179 = vunpack.c.l.b16 %v110
    %v180 = vunpack.c.l.b16 %v111
    %v181 = vunpack.c.l.b16 %v112
    %v182 = vunpack.c.l.b16 %v113
    %v183 = vunpack.c.l.b16 %v114
    %v184 = vunpack.c.l.b16 %v115
    %v185 = vunpack.c.l.b16 %v116
    %v186 = vunpack.c.l.b16 %v117
    %v187 = vunpack.c.l.b16 %v118
    %v188 = vunpack.c.l.b16 %v119
    %v189 = vunpack.c.l.b16 %v120
    %v190 = vunpack.c.l.b16 %v121
    %v191 = vunpack.c.l.b16 %v122
    %v192 = vunpack.c.l.b16 %v123
    %v193 = vunpack.c.l.b16 %v124
    %v194 = vunpack.c.l.b16 %v125
    %v195 = vunpack.c.l.b16 %v126
    %v196 = vunpack.c.l.b16 %v127
    %v197 = vunpack.c.l.b16 %v128
    %v198 = vunpack.c.l.b16 %v129
    %v199 = vunpack.c.l.b16 %v130
    %v200 = vunpack.c.l.b16 %v131
    %v201 = vunpack.c.l.b16 %v132
    %v202 = vunpack.c.l.b16 %v133
    %v203 = vunpack.c.l.b16 %v134
    %v204 = vunpack.c.l.b16 %v135
    %v205 = vunpack.c.l.b16 %v136
    %v206 = vpack.c.b16 %v175, %v174
    %v207 = vpack.c.b16 %v177, %v176
    %v208 = vpack.c.b16 %v179, %v178
    %v209 = vpack.c.b16 %v181, %v180
    %v210 = vpack.c.b16 %v183, %v182
    %v211 = vpack.c.b16 %v185, %v184
    %v212 = vpack.c.b16 %v187, %v186
    %v213 = vpack.c.b16 %v189, %v188
    %v214 = vpack.c.b16 %v191, %v190
    %v215 = vpack.c.b16 %v193, %v192
    %v216 = vpack.c.b16 %v195, %v194
    %v217 = vpack.c.b16 %v197, %v196
    %v218 = vpack.c.b16 %v199, %v198
    %v219 = vpack.c.b16 %v201, %v200
    %v220 = vpack.c.b16 %v203, %v202
    %v221 = vpack.c.b16 %v205, %v204
    %238 = vmatprep.subr.bf16.mxu0 0
    %239 = vmatpush1.bf16.msra.mxu0 %v206
    %240 = vmatprep.subr.bf16.mxu0 0
    %241 = vmatpush1.bf16.msra.mxu0 %v207
    %242 = vmatprep.subr.bf16.mxu0 0
    %243 = vmatpush1.bf16.msra.mxu0 %v208
    %244 = vmatprep.subr.bf16.mxu0 0
    %245 = vmatpush1.bf16.msra.mxu0 %v209
    %246 = vmatprep.subr.bf16.mxu0 0
    %247 = vmatpush1.bf16.msra.mxu0 %v210
    %248 = vmatprep.subr.bf16.mxu0 0
    %249 = vmatpush1.bf16.msra.mxu0 %v211
    %250 = vmatprep.subr.bf16.mxu0 0
    %251 = vmatpush1.bf16.msra.mxu0 %v212
    %252 = vmatprep.subr.bf16.mxu0 0
    %253 = vmatpush1.bf16.msra.mxu0 %v213
    %254 = vmatprep.subr.bf16.mxu0 0
    %255 = vmatpush1.bf16.msra.mxu0 %v214
    %256 = vmatprep.subr.bf16.mxu0 0
    %257 = vmatpush1.bf16.msra.mxu0 %v215
    %258 = vmatprep.subr.bf16.mxu0 0
    %259 = vmatpush1.bf16.msra.mxu0 %v216
    %260 = vmatprep.subr.bf16.mxu0 0
    %261 = vmatpush1.bf16.msra.mxu0 %v217
    %262 = vmatprep.subr.bf16.mxu0 0
    %263 = vmatpush1.bf16.msra.mxu0 %v218
    %264 = vmatprep.subr.bf16.mxu0 0
    %265 = vmatpush1.bf16.msra.mxu0 %v219
    %266 = vmatprep.subr.bf16.mxu0 0
    %267 = vmatpush1.bf16.msra.mxu0 %v220
    %268 = vmatprep.subr.bf16.mxu0 0
    %269 = vmatpush1.bf16.msra.mxu0 %v221
    %270 = vmatprep.mubr.bf16.mxu0 %v102
    %271 = vmatmul.mubr.bf16.gmra.mrb[0].mxu0 %v101
    %v272 = vpop.f32.mrb[0].mxu0
    %v273 = vadd.f32 %v141, %v272
    %v274 = vpop.f32.mrb[0].mxu0
    %v275 = vpop.f32.mrb[0].mxu0
    %v276 = vadd.f32 %v141, %v275
    %v277 = vpop.f32.mrb[0].mxu0
    %278 = vmatprep.mubr.bf16.mxu0 %v104
    %279 = vmatmul.mubr.bf16.gmra.mrb[0].mxu0 %v103
    %v280 = vpop.f32.mrb[0].mxu0
    %v281 = vadd.f32 %v141, %v280
    %v282 = vpop.f32.mrb[0].mxu0
    %v283 = vpop.f32.mrb[0].mxu0
    %v284 = vadd.f32 %v141, %v283
    %v285 = vpop.f32.mrb[0].mxu0
    %286 = vdwg.mxu0
    %v287 = vmax.f32 %v273, 0.0
    %v288 = vmax.f32 %v276, 0.0
    %v289 = vmax.f32 %v281, 0.0
    %v290 = vmax.f32 %v284, 0.0
    %v291 = vpack.c.bf16 %v288, %v287
    %v292 = vpack.c.bf16 %v290, %v289
    %v293 = vld [vmem:[#allocation5] sm:$0xf]
    %v294 = vld [vmem:[#allocation5 + $0x4] sm:$0xf]
    %v295 = vld [vmem:[#allocation5 + $0x8] sm:$0xf]
    %v296 = vld [vmem:[#allocation5 + $0xc] sm:$0xf]
    %v301 = vunpack.c.l.b16 %v293
    %v302 = vunpack.c.l.b16 %v294
    %v303 = vunpack.c.l.b16 %v295
    %v304 = vunpack.c.l.b16 %v296
    %v305 = vpack.c.b16 %v302, %v301
    %v306 = vpack.c.b16 %v304, %v303
    %vm307 = vcmask 261120
    %v309 = vsel %vm307, %v305, 0
    %v312 = vsel %vm307, %v306, 0
    %314 = vmatprep.subr.bf16.mxu0 0
    %315 = vmatpush1.bf16.msra.mxu0 %v291
    %316 = vmatprep.subr.bf16.mxu0 0
    %317 = vmatpush1.bf16.msra.mxu0 %v292
    %318 = vmatprep.subr.bf16.mxu0 0
    %319 = vmatpush1.bf16.msra.mxu0 0
    %320 = vmatprep.subr.bf16.mxu0 0
    %321 = vmatpush1.bf16.msra.mxu0 0
    %322 = vmatprep.subr.bf16.mxu0 0
    %323 = vmatpush1.bf16.msra.mxu0 0
    %324 = vmatprep.subr.bf16.mxu0 0
    %325 = vmatpush1.bf16.msra.mxu0 0
    %326 = vmatprep.subr.bf16.mxu0 0
    %327 = vmatpush1.bf16.msra.mxu0 0
    %328 = vmatprep.subr.bf16.mxu0 0
    %329 = vmatpush1.bf16.msra.mxu0 0
    %330 = vmatprep.subr.bf16.mxu0 0
    %331 = vmatpush1.bf16.msra.mxu0 0
    %332 = vmatprep.subr.bf16.mxu0 0
    %333 = vmatpush1.bf16.msra.mxu0 0
    %334 = vmatprep.subr.bf16.mxu0 0
    %335 = vmatpush1.bf16.msra.mxu0 0
    %336 = vmatprep.subr.bf16.mxu0 0
    %337 = vmatpush1.bf16.msra.mxu0 0
    %338 = vmatprep.subr.bf16.mxu0 0
    %339 = vmatpush1.bf16.msra.mxu0 0
    %340 = vmatprep.subr.bf16.mxu0 0
    %341 = vmatpush1.bf16.msra.mxu0 0
    %342 = vmatprep.subr.bf16.mxu0 0
    %343 = vmatpush1.bf16.msra.mxu0 0
    %344 = vmatprep.subr.bf16.mxu0 0
    %345 = vmatpush1.bf16.msra.mxu0 0
    %346 = vmatprep.mubr.bf16.mxu0 0
    %347 = vmatmul.mubr.bf16.gmra.mrb[0].mxu0 %v309
    %v348 = vpop.f32.mrb[0].mxu0
    %v349 = vadd.f32 0.0, %v348
    %v350 = vpop.f32.mrb[0].mxu0
    %v351 = vpop.f32.mrb[0].mxu0
    %v352 = vadd.f32 0.0, %v351
    %v353 = vpop.f32.mrb[0].mxu0
    %354 = vmatprep.mubr.bf16.mxu0 0
    %355 = vmatmul.mubr.bf16.gmra.mrb[0].mxu0 %v312
    %v356 = vpop.f32.mrb[0].mxu0
    %v357 = vadd.f32 0.0, %v356
    %v358 = vpop.f32.mrb[0].mxu0
    %v359 = vpop.f32.mrb[0].mxu0
    %v360 = vadd.f32 0.0, %v359
    %v361 = vpop.f32.mrb[0].mxu0
    %362 = vdwg.mxu0
    %v363 = vpack.c.bf16 %v352, %v349
    %v364 = vpack.c.bf16 %v360, %v357
    %s365 = scalar_lea.vmem [#allocation5], 16
    %v366 = vld [vmem:[%s365] sm:$0xf]
    %v367 = vld [vmem:[%s365 + $0x4] sm:$0xf]
    %v368 = vld [vmem:[%s365 + $0x8] sm:$0xf]
    %v369 = vld [vmem:[%s365 + $0xc] sm:$0xf]
    %v374 = vunpack.c.l.b16 %v366
    %v375 = vunpack.c.l.b16 %v367
    %v376 = vunpack.c.l.b16 %v368
    %v377 = vunpack.c.l.b16 %v369
    %v378 = vpack.c.b16 %v375, %v374
    %v379 = vpack.c.b16 %v377, %v376
    %v381 = vsel %vm307, %v378, 0
    %v384 = vsel %vm307, %v379, 0
    %386 = vmatprep.subr.bf16.mxu0 0
    %387 = vmatpush1.bf16.msra.mxu0 %v291
    %388 = vmatprep.subr.bf16.mxu0 0
    %389 = vmatpush1.bf16.msra.mxu0 %v292
    %390 = vmatprep.subr.bf16.mxu0 0
    %391 = vmatpush1.bf16.msra.mxu0 0
    %392 = vmatprep.subr.bf16.mxu0 0
    %393 = vmatpush1.bf16.msra.mxu0 0
    %394 = vmatprep.subr.bf16.mxu0 0
    %395 = vmatpush1.bf16.msra.mxu0 0
    %396 = vmatprep.subr.bf16.mxu0 0
    %397 = vmatpush1.bf16.msra.mxu0 0
    %398 = vmatprep.subr.bf16.mxu0 0
    %399 = vmatpush1.bf16.msra.mxu0 0
    %400 = vmatprep.subr.bf16.mxu0 0
    %401 = vmatpush1.bf16.msra.mxu0 0
    %402 = vmatprep.subr.bf16.mxu0 0
    %403 = vmatpush1.bf16.msra.mxu0 0
    %404 = vmatprep.subr.bf16.mxu0 0
    %405 = vmatpush1.bf16.msra.mxu0 0
    %406 = vmatprep.subr.bf16.mxu0 0
    %407 = vmatpush1.bf16.msra.mxu0 0
    %408 = vmatprep.subr.bf16.mxu0 0
    %409 = vmatpush1.bf16.msra.mxu0 0
    %410 = vmatprep.subr.bf16.mxu0 0
    %411 = vmatpush1.bf16.msra.mxu0 0
    %412 = vmatprep.subr.bf16.mxu0 0
    %413 = vmatpush1.bf16.msra.mxu0 0
    %414 = vmatprep.subr.bf16.mxu0 0
    %415 = vmatpush1.bf16.msra.mxu0 0
    %416 = vmatprep.subr.bf16.mxu0 0
    %417 = vmatpush1.bf16.msra.mxu0 0
    %418 = vmatprep.mubr.bf16.mxu0 0
    %419 = vmatmul.mubr.bf16.gmra.mrb[0].mxu0 %v381
    %v420 = vpop.f32.mrb[0].mxu0
    %v421 = vadd.f32 0.0, %v420
    %v422 = vpop.f32.mrb[0].mxu0
    %v423 = vpop.f32.mrb[0].mxu0
    %v424 = vadd.f32 0.0, %v423
    %v425 = vpop.f32.mrb[0].mxu0
    %426 = vmatprep.mubr.bf16.mxu0 0
    %427 = vmatmul.mubr.bf16.gmra.mrb[0].mxu0 %v384
    %v428 = vpop.f32.mrb[0].mxu0
    %v429 = vadd.f32 0.0, %v428
    %v430 = vpop.f32.mrb[0].mxu0
    %v431 = vpop.f32.mrb[0].mxu0
    %v432 = vadd.f32 0.0, %v431
    %v433 = vpop.f32.mrb[0].mxu0
    %434 = vdwg.mxu0
    %v435 = vpack.c.bf16 %v424, %v421
    %v436 = vpack.c.bf16 %v432, %v429
    %v437 = vld [vmem:[#allocation8] sm:$0xf]
    %v438 = vld [vmem:[#allocation8 + $0x4] sm:$0xf]
    %v439 = vld [vmem:[#allocation8 + $0x8] sm:$0xf]
    %v440 = vld [vmem:[#allocation8 + $0xc] sm:$0xf]
    %v441 = vld [vmem:[#allocation8 + $0x10] sm:$0xf]
    %v442 = vld [vmem:[#allocation8 + $0x14] sm:$0xf]
    %v443 = vld [vmem:[#allocation8 + $0x18] sm:$0xf]
    %v444 = vld [vmem:[#allocation8 + $0x1c] sm:$0xf]
    %v445 = vld [vmem:[#allocation8 + $0x20] sm:$0xf]
    %v446 = vld [vmem:[#allocation8 + $0x24] sm:$0xf]
    %v447 = vld [vmem:[#allocation8 + $0x28] sm:$0xf]
    %v448 = vld [vmem:[#allocation8 + $0x2c] sm:$0xf]
    %v449 = vld [vmem:[#allocation8 + $0x30] sm:$0xf]
    %v450 = vld [vmem:[#allocation8 + $0x34] sm:$0xf]
    %v451 = vld [vmem:[#allocation8 + $0x38] sm:$0xf]
    %v452 = vld [vmem:[#allocation8 + $0x3c] sm:$0xf]
    %s453 = scalar_lea.vmem [#allocation8], 64
    %v454 = vld [vmem:[%s453] sm:$0xf]
    %v455 = vld [vmem:[%s453 + $0x4] sm:$0xf]
    %v456 = vld [vmem:[%s453 + $0x8] sm:$0xf]
    %v457 = vld [vmem:[%s453 + $0xc] sm:$0xf]
    %v458 = vld [vmem:[%s453 + $0x10] sm:$0xf]
    %v459 = vld [vmem:[%s453 + $0x14] sm:$0xf]
    %v460 = vld [vmem:[%s453 + $0x18] sm:$0xf]
    %v461 = vld [vmem:[%s453 + $0x1c] sm:$0xf]
    %v462 = vld [vmem:[%s453 + $0x20] sm:$0xf]
    %v463 = vld [vmem:[%s453 + $0x24] sm:$0xf]
    %v464 = vld [vmem:[%s453 + $0x28] sm:$0xf]
    %v465 = vld [vmem:[%s453 + $0x2c] sm:$0xf]
    %v466 = vld [vmem:[%s453 + $0x30] sm:$0xf]
    %v467 = vld [vmem:[%s453 + $0x34] sm:$0xf]
    %v468 = vld [vmem:[%s453 + $0x38] sm:$0xf]
    %v469 = vld [vmem:[%s453 + $0x3c] sm:$0xf]
    %v486 = vunpack.c.l.b16 %v454
    %v487 = vunpack.c.l.b16 %v455
    %v488 = vunpack.c.l.b16 %v456
    %v489 = vunpack.c.l.b16 %v457
    %v490 = vunpack.c.l.b16 %v458
    %v491 = vunpack.c.l.b16 %v459
    %v492 = vunpack.c.l.b16 %v460
    %v493 = vunpack.c.l.b16 %v461
    %v494 = vunpack.c.l.b16 %v462
    %v495 = vunpack.c.l.b16 %v463
    %v496 = vunpack.c.l.b16 %v464
    %v497 = vunpack.c.l.b16 %v465
    %v498 = vunpack.c.l.b16 %v466
    %v499 = vunpack.c.l.b16 %v467
    %v500 = vunpack.c.l.b16 %v468
    %v501 = vunpack.c.l.b16 %v469
    %v502 = vpack.c.b16 %v487, %v486
    %v503 = vpack.c.b16 %v489, %v488
    %v504 = vpack.c.b16 %v491, %v490
    %v505 = vpack.c.b16 %v493, %v492
    %v506 = vpack.c.b16 %v495, %v494
    %v507 = vpack.c.b16 %v497, %v496
    %v508 = vpack.c.b16 %v499, %v498
    %v509 = vpack.c.b16 %v501, %v500
    %518 = vmatprep.subr.bf16.mxu0 0
    %519 = vmatpush1.bf16.msra.mxu0 %v502
    %520 = vmatprep.subr.bf16.mxu0 0
    %521 = vmatpush1.bf16.msra.mxu0 %v503
    %522 = vmatprep.subr.bf16.mxu0 0
    %523 = vmatpush1.bf16.msra.mxu0 %v504
    %524 = vmatprep.subr.bf16.mxu0 0
    %525 = vmatpush1.bf16.msra.mxu0 %v505
    %526 = vmatprep.subr.bf16.mxu0 0
    %527 = vmatpush1.bf16.msra.mxu0 %v506
    %528 = vmatprep.subr.bf16.mxu0 0
    %529 = vmatpush1.bf16.msra.mxu0 %v507
    %530 = vmatprep.subr.bf16.mxu0 0
    %531 = vmatpush1.bf16.msra.mxu0 %v508
    %532 = vmatprep.subr.bf16.mxu0 0
    %533 = vmatpush1.bf16.msra.mxu0 %v509
    %534 = vmatprep.subr.bf16.mxu0 0
    %535 = vmatpush1.bf16.msra.mxu0 0
    %536 = vmatprep.subr.bf16.mxu0 0
    %537 = vmatpush1.bf16.msra.mxu0 0
    %538 = vmatprep.subr.bf16.mxu0 0
    %539 = vmatpush1.bf16.msra.mxu0 0
    %540 = vmatprep.subr.bf16.mxu0 0
    %541 = vmatpush1.bf16.msra.mxu0 0
    %542 = vmatprep.subr.bf16.mxu0 0
    %543 = vmatpush1.bf16.msra.mxu0 0
    %544 = vmatprep.subr.bf16.mxu0 0
    %545 = vmatpush1.bf16.msra.mxu0 0
    %546 = vmatprep.subr.bf16.mxu0 0
    %547 = vmatpush1.bf16.msra.mxu0 0
    %548 = vmatprep.subr.bf16.mxu0 0
    %549 = vmatpush1.bf16.msra.mxu0 0
    %550 = vmatprep.mubr.bf16.mxu0 0
    %551 = vmatmul.mubr.bf16.gmra.mrb[0].mxu0 %v291
    %v552 = vpop.f32.mrb[0].mxu0
    %v553 = vadd.f32 0.0, %v552
    %v554 = vpop.f32.mrb[0].mxu0
    %v555 = vpop.f32.mrb[0].mxu0
    %v556 = vadd.f32 0.0, %v555
    %v557 = vpop.f32.mrb[0].mxu0
    %558 = vmatprep.mubr.bf16.mxu0 0
    %559 = vmatmul.mubr.bf16.gmra.mrb[0].mxu0 %v292
    %v560 = vpop.f32.mrb[0].mxu0
    %v561 = vadd.f32 0.0, %v560
    %v562 = vpop.f32.mrb[0].mxu0
    %v563 = vpop.f32.mrb[0].mxu0
    %v564 = vadd.f32 0.0, %v563
    %v565 = vpop.f32.mrb[0].mxu0
    %566 = vdwg.mxu0
    %v583 = vunpack.c.l.b16 %v437
    %v584 = vunpack.c.l.b16 %v438
    %v585 = vunpack.c.l.b16 %v439
    %v586 = vunpack.c.l.b16 %v440
    %v587 = vunpack.c.l.b16 %v441
    %v588 = vunpack.c.l.b16 %v442
    %v589 = vunpack.c.l.b16 %v443
    %v590 = vunpack.c.l.b16 %v444
    %v591 = vunpack.c.l.b16 %v445
    %v592 = vunpack.c.l.b16 %v446
    %v593 = vunpack.c.l.b16 %v447
    %v594 = vunpack.c.l.b16 %v448
    %v595 = vunpack.c.l.b16 %v449
    %v596 = vunpack.c.l.b16 %v450
    %v597 = vunpack.c.l.b16 %v451
    %v598 = vunpack.c.l.b16 %v452
    %v599 = vpack.c.b16 %v584, %v583
    %v600 = vpack.c.b16 %v586, %v585
    %v601 = vpack.c.b16 %v588, %v587
    %v602 = vpack.c.b16 %v590, %v589
    %v603 = vpack.c.b16 %v592, %v591
    %v604 = vpack.c.b16 %v594, %v593
    %v605 = vpack.c.b16 %v596, %v595
    %v606 = vpack.c.b16 %v598, %v597
    %615 = vmatprep.subr.bf16.mxu0 0
    %616 = vmatpush1.bf16.msra.mxu0 %v599
    %617 = vmatprep.subr.bf16.mxu0 0
    %618 = vmatpush1.bf16.msra.mxu0 %v600
    %619 = vmatprep.subr.bf16.mxu0 0
    %620 = vmatpush1.bf16.msra.mxu0 %v601
    %621 = vmatprep.subr.bf16.mxu0 0
    %622 = vmatpush1.bf16.msra.mxu0 %v602
    %623 = vmatprep.subr.bf16.mxu0 0
    %624 = vmatpush1.bf16.msra.mxu0 %v603
    %625 = vmatprep.subr.bf16.mxu0 0
    %626 = vmatpush1.bf16.msra.mxu0 %v604
    %627 = vmatprep.subr.bf16.mxu0 0
    %628 = vmatpush1.bf16.msra.mxu0 %v605
    %629 = vmatprep.subr.bf16.mxu0 0
    %630 = vmatpush1.bf16.msra.mxu0 %v606
    %631 = vmatprep.subr.bf16.mxu0 0
    %632 = vmatpush1.bf16.msra.mxu0 0
    %633 = vmatprep.subr.bf16.mxu0 0
    %634 = vmatpush1.bf16.msra.mxu0 0
    %635 = vmatprep.subr.bf16.mxu0 0
    %636 = vmatpush1.bf16.msra.mxu0 0
    %637 = vmatprep.subr.bf16.mxu0 0
    %638 = vmatpush1.bf16.msra.mxu0 0
    %639 = vmatprep.subr.bf16.mxu0 0
    %640 = vmatpush1.bf16.msra.mxu0 0
    %641 = vmatprep.subr.bf16.mxu0 0
    %642 = vmatpush1.bf16.msra.mxu0 0
    %643 = vmatprep.subr.bf16.mxu0 0
    %644 = vmatpush1.bf16.msra.mxu0 0
    %645 = vmatprep.subr.bf16.mxu0 0
    %646 = vmatpush1.bf16.msra.mxu0 0
    %647 = vmatprep.mubr.bf16.mxu0 0
    %648 = vmatmul.mubr.bf16.gmra.mrb[0].mxu0 %v363
    %v649 = vpop.f32.mrb[0].mxu0
    %v650 = vadd.f32 %v553, %v649
    %v651 = vpop.f32.mrb[0].mxu0
    %v652 = vpop.f32.mrb[0].mxu0
    %v653 = vadd.f32 %v556, %v652
    %v654 = vpop.f32.mrb[0].mxu0
    %655 = vmatprep.mubr.bf16.mxu0 0
    %656 = vmatmul.mubr.bf16.gmra.mrb[0].mxu0 %v364
    %v657 = vpop.f32.mrb[0].mxu0
    %v658 = vadd.f32 %v561, %v657
    %v659 = vpop.f32.mrb[0].mxu0
    %v660 = vpop.f32.mrb[0].mxu0
    %v661 = vadd.f32 %v564, %v660
    %v662 = vpop.f32.mrb[0].mxu0
    %663 = vdwg.mxu0
    %s664 = scalar_lea.vmem [#allocation8], 128
    %v665 = vld [vmem:[%s664] sm:$0xf]
    %v666 = vld [vmem:[%s664 + $0x4] sm:$0xf]
    %v667 = vld [vmem:[%s664 + $0x8] sm:$0xf]
    %v668 = vld [vmem:[%s664 + $0xc] sm:$0xf]
    %v669 = vld [vmem:[%s664 + $0x10] sm:$0xf]
    %v670 = vld [vmem:[%s664 + $0x14] sm:$0xf]
    %v671 = vld [vmem:[%s664 + $0x18] sm:$0xf]
    %v672 = vld [vmem:[%s664 + $0x1c] sm:$0xf]
    %v673 = vld [vmem:[%s664 + $0x20] sm:$0xf]
    %v674 = vld [vmem:[%s664 + $0x24] sm:$0xf]
    %v675 = vld [vmem:[%s664 + $0x28] sm:$0xf]
    %v676 = vld [vmem:[%s664 + $0x2c] sm:$0xf]
    %v677 = vld [vmem:[%s664 + $0x30] sm:$0xf]
    %v678 = vld [vmem:[%s664 + $0x34] sm:$0xf]
    %v679 = vld [vmem:[%s664 + $0x38] sm:$0xf]
    %v680 = vld [vmem:[%s664 + $0x3c] sm:$0xf]
    %v697 = vunpack.c.l.b16 %v665
    %v698 = vunpack.c.l.b16 %v666
    %v699 = vunpack.c.l.b16 %v667
    %v700 = vunpack.c.l.b16 %v668
    %v701 = vunpack.c.l.b16 %v669
    %v702 = vunpack.c.l.b16 %v670
    %v703 = vunpack.c.l.b16 %v671
    %v704 = vunpack.c.l.b16 %v672
    %v705 = vunpack.c.l.b16 %v673
    %v706 = vunpack.c.l.b16 %v674
    %v707 = vunpack.c.l.b16 %v675
    %v708 = vunpack.c.l.b16 %v676
    %v709 = vunpack.c.l.b16 %v677
    %v710 = vunpack.c.l.b16 %v678
    %v711 = vunpack.c.l.b16 %v679
    %v712 = vunpack.c.l.b16 %v680
    %v713 = vpack.c.b16 %v698, %v697
    %v714 = vpack.c.b16 %v700, %v699
    %v715 = vpack.c.b16 %v702, %v701
    %v716 = vpack.c.b16 %v704, %v703
    %v717 = vpack.c.b16 %v706, %v705
    %v718 = vpack.c.b16 %v708, %v707
    %v719 = vpack.c.b16 %v710, %v709
    %v720 = vpack.c.b16 %v712, %v711
    %729 = vmatprep.subr.bf16.mxu0 0
    %730 = vmatpush1.bf16.msra.mxu0 %v713
    %731 = vmatprep.subr.bf16.mxu0 0
    %732 = vmatpush1.bf16.msra.mxu0 %v714
    %733 = vmatprep.subr.bf16.mxu0 0
    %734 = vmatpush1.bf16.msra.mxu0 %v715
    %735 = vmatprep.subr.bf16.mxu0 0
    %736 = vmatpush1.bf16.msra.mxu0 %v716
    %737 = vmatprep.subr.bf16.mxu0 0
    %738 = vmatpush1.bf16.msra.mxu0 %v717
    %739 = vmatprep.subr.bf16.mxu0 0
    %740 = vmatpush1.bf16.msra.mxu0 %v718
    %741 = vmatprep.subr.bf16.mxu0 0
    %742 = vmatpush1.bf16.msra.mxu0 %v719
    %743 = vmatprep.subr.bf16.mxu0 0
    %744 = vmatpush1.bf16.msra.mxu0 %v720
    %745 = vmatprep.subr.bf16.mxu0 0
    %746 = vmatpush1.bf16.msra.mxu0 0
    %747 = vmatprep.subr.bf16.mxu0 0
    %748 = vmatpush1.bf16.msra.mxu0 0
    %749 = vmatprep.subr.bf16.mxu0 0
    %750 = vmatpush1.bf16.msra.mxu0 0
    %751 = vmatprep.subr.bf16.mxu0 0
    %752 = vmatpush1.bf16.msra.mxu0 0
    %753 = vmatprep.subr.bf16.mxu0 0
    %754 = vmatpush1.bf16.msra.mxu0 0
    %755 = vmatprep.subr.bf16.mxu0 0
    %756 = vmatpush1.bf16.msra.mxu0 0
    %757 = vmatprep.subr.bf16.mxu0 0
    %758 = vmatpush1.bf16.msra.mxu0 0
    %759 = vmatprep.subr.bf16.mxu0 0
    %760 = vmatpush1.bf16.msra.mxu0 0
    %761 = vmatprep.mubr.bf16.mxu0 0
    %762 = vmatmul.mubr.bf16.gmra.mrb[0].mxu0 %v435
    %v763 = vpop.f32.mrb[0].mxu0
    %v764 = vadd.f32 0.0, %v763
    %v765 = vpop.f32.mrb[0].mxu0
    %v766 = vpop.f32.mrb[0].mxu0
    %v767 = vadd.f32 0.0, %v766
    %v768 = vpop.f32.mrb[0].mxu0
    %769 = vmatprep.mubr.bf16.mxu0 0
    %770 = vmatmul.mubr.bf16.gmra.mrb[0].mxu0 %v436
    %v771 = vpop.f32.mrb[0].mxu0
    %v772 = vadd.f32 0.0, %v771
    %v773 = vpop.f32.mrb[0].mxu0
    %v774 = vpop.f32.mrb[0].mxu0
    %v775 = vadd.f32 0.0, %v774
    %v776 = vpop.f32.mrb[0].mxu0
    %777 = vdwg.mxu0
    %v778 = vadd.f32 %v650, %v764
    %v779 = vadd.f32 %v653, %v767
    %v780 = vadd.f32 %v658, %v772
    %v781 = vadd.f32 %v661, %v775
    %v782 = vld [vmem:[%s5 + $0x1] sm:$0x1]
    %v783 = vlaneseq
    %v784 = vshrl.u32 %v783, 7
    %v785 = vsub.s32 0, %v784
    %v786 = vrot.slane %v782, %v785
    %v787 = vadd.f32 %v778, %v786
    %v788 = vadd.f32 %v779, %v786
    %v789 = vadd.f32 %v780, %v786
    %v790 = vadd.f32 %v781, %v786
    %v791 = vmax.f32 %v787, 0.0
    %v792 = vmax.f32 %v788, 0.0
    %v793 = vmax.f32 %v789, 0.0
    %v794 = vmax.f32 %v790, 0.0
    %v795 = vpack.c.bf16 %v792, %v791
    %v796 = vpack.c.bf16 %v794, %v793
    %v797 = vld [vmem:[#allocation10] sm:$0xff]
    %v798 = vld [vmem:[#allocation10 + $0x8] sm:$0xff]
    %v799 = vld [vmem:[#allocation10 + $0x10] sm:$0xff]
    %v800 = vld [vmem:[#allocation10 + $0x18] sm:$0xff]
    %v801 = vld [vmem:[#allocation10 + $0x20] sm:$0xff]
    %v802 = vld [vmem:[#allocation10 + $0x28] sm:$0xff]
    %v803 = vld [vmem:[#allocation10 + $0x30] sm:$0xff]
    %v804 = vld [vmem:[#allocation10 + $0x38] sm:$0xff]
    %v805 = vld [vmem:[#allocation10 + $0x40] sm:$0xff]
    %v806 = vld [vmem:[#allocation10 + $0x48] sm:$0xff]
    %v807 = vld [vmem:[#allocation10 + $0x50] sm:$0xff]
    %v808 = vld [vmem:[#allocation10 + $0x58] sm:$0xff]
    %v809 = vld [vmem:[#allocation10 + $0x60] sm:$0xff]
    %v810 = vld [vmem:[#allocation10 + $0x68] sm:$0xff]
    %v811 = vld [vmem:[#allocation10 + $0x70] sm:$0xff]
    %v812 = vld [vmem:[#allocation10 + $0x78] sm:$0xff]
    %s813 = scalar_lea.vmem %s5, 2
    %v814 = vld [vmem:[%s813] ss:$4 sm:$0x3]
    %v816 = vlaneseq
    %v817 = vshrl.u32 %v816, 7
    %v818 = vsub.s32 0, %v817
    %v819 = vrot.slane %v814, %v818
    %v820 = vlaneseq
    %v821 = vshrl.u32 %v820, 7
    %v822 = vsub.s32 1, %v821
    %v823 = vrot.slane %v814, %v822
    %v842 = vunpack.c.l.b16 %v797
    %v843 = vunpack.c.h.b16 %v797
    %v844 = vunpack.c.l.b16 %v798
    %v845 = vunpack.c.h.b16 %v798
    %v846 = vunpack.c.l.b16 %v799
    %v847 = vunpack.c.h.b16 %v799
    %v848 = vunpack.c.l.b16 %v800
    %v849 = vunpack.c.h.b16 %v800
    %v850 = vunpack.c.l.b16 %v801
    %v851 = vunpack.c.h.b16 %v801
    %v852 = vunpack.c.l.b16 %v802
    %v853 = vunpack.c.h.b16 %v802
    %v854 = vunpack.c.l.b16 %v803
    %v855 = vunpack.c.h.b16 %v803
    %v856 = vunpack.c.l.b16 %v804
    %v857 = vunpack.c.h.b16 %v804
    %v858 = vunpack.c.l.b16 %v805
    %v859 = vunpack.c.h.b16 %v805
    %v860 = vunpack.c.l.b16 %v806
    %v861 = vunpack.c.h.b16 %v806
    %v862 = vunpack.c.l.b16 %v807
    %v863 = vunpack.c.h.b16 %v807
    %v864 = vunpack.c.l.b16 %v808
    %v865 = vunpack.c.h.b16 %v808
    %v866 = vunpack.c.l.b16 %v809
    %v867 = vunpack.c.h.b16 %v809
    %v868 = vunpack.c.l.b16 %v810
    %v869 = vunpack.c.h.b16 %v810
    %v870 = vunpack.c.l.b16 %v811
    %v871 = vunpack.c.h.b16 %v811
    %v872 = vunpack.c.l.b16 %v812
    %v873 = vunpack.c.h.b16 %v812
    %v874 = vpack.c.b16 %v844, %v842
    %v875 = vpack.c.b16 %v845, %v843
    %v876 = vpack.c.b16 %v848, %v846
    %v877 = vpack.c.b16 %v849, %v847
    %v878 = vpack.c.b16 %v852, %v850
    %v879 = vpack.c.b16 %v853, %v851
    %v880 = vpack.c.b16 %v856, %v854
    %v881 = vpack.c.b16 %v857, %v855
    %v882 = vpack.c.b16 %v860, %v858
    %v883 = vpack.c.b16 %v861, %v859
    %v884 = vpack.c.b16 %v864, %v862
    %v885 = vpack.c.b16 %v865, %v863
    %v886 = vpack.c.b16 %v868, %v866
    %v887 = vpack.c.b16 %v869, %v867
    %v888 = vpack.c.b16 %v872, %v870
    %v889 = vpack.c.b16 %v873, %v871
    %906 = vmatprep.subr.bf16.mxu0 %v875
    %907 = vmatpush1.bf16.msra.mxu0 %v874
    %908 = vmatprep.subr.bf16.mxu0 %v877
    %909 = vmatpush1.bf16.msra.mxu0 %v876
    %910 = vmatprep.subr.bf16.mxu0 %v879
    %911 = vmatpush1.bf16.msra.mxu0 %v878
    %912 = vmatprep.subr.bf16.mxu0 %v881
    %913 = vmatpush1.bf16.msra.mxu0 %v880
    %914 = vmatprep.subr.bf16.mxu0 %v883
    %915 = vmatpush1.bf16.msra.mxu0 %v882
    %916 = vmatprep.subr.bf16.mxu0 %v885
    %917 = vmatpush1.bf16.msra.mxu0 %v884
    %918 = vmatprep.subr.bf16.mxu0 %v887
    %919 = vmatpush1.bf16.msra.mxu0 %v886
    %920 = vmatprep.subr.bf16.mxu0 %v889
    %921 = vmatpush1.bf16.msra.mxu0 %v888
    %922 = vmatprep.subr.bf16.mxu0 0
    %923 = vmatpush1.bf16.msra.mxu0 0
    %924 = vmatprep.subr.bf16.mxu0 0
    %925 = vmatpush1.bf16.msra.mxu0 0
    %926 = vmatprep.subr.bf16.mxu0 0
    %927 = vmatpush1.bf16.msra.mxu0 0
    %928 = vmatprep.subr.bf16.mxu0 0
    %929 = vmatpush1.bf16.msra.mxu0 0
    %930 = vmatprep.subr.bf16.mxu0 0
    %931 = vmatpush1.bf16.msra.mxu0 0
    %932 = vmatprep.subr.bf16.mxu0 0
    %933 = vmatpush1.bf16.msra.mxu0 0
    %934 = vmatprep.subr.bf16.mxu0 0
    %935 = vmatpush1.bf16.msra.mxu0 0
    %936 = vmatprep.subr.bf16.mxu0 0
    %937 = vmatpush1.bf16.msra.mxu0 0
    %938 = vmatprep.mubr.bf16.mxu0 0
    %939 = vmatmul.mubr.bf16.gmra.mrb[0].mxu0 %v795
    %v940 = vpop.f32.mrb[0].mxu0
    %v941 = vadd.f32 %v819, %v940
    %v942 = vpop.f32.mrb[0].mxu0
    %v943 = vadd.f32 %v823, %v942
    %v944 = vpop.f32.mrb[0].mxu0
    %v945 = vadd.f32 %v819, %v944
    %v946 = vpop.f32.mrb[0].mxu0
    %v947 = vadd.f32 %v823, %v946
    %948 = vmatprep.mubr.bf16.mxu0 0
    %949 = vmatmul.mubr.bf16.gmra.mrb[0].mxu0 %v796
    %v950 = vpop.f32.mrb[0].mxu0
    %v951 = vadd.f32 %v819, %v950
    %v952 = vpop.f32.mrb[0].mxu0
    %v953 = vadd.f32 %v823, %v952
    %v954 = vpop.f32.mrb[0].mxu0
    %v955 = vadd.f32 %v819, %v954
    %v956 = vpop.f32.mrb[0].mxu0
    %v957 = vadd.f32 %v823, %v956
    %958 = vdwg.mxu0
    %v959 = vadd.f32 %v941, %v93
    %v960 = vadd.f32 %v943, %v94
    %v961 = vadd.f32 %v945, %v95
    %v962 = vadd.f32 %v947, %v96
    %v963 = vadd.f32 %v951, %v97
    %v964 = vadd.f32 %v953, %v98
    %v965 = vadd.f32 %v955, %v99
    %v966 = vadd.f32 %v957, %v100
    %v967 = vmax.f32 %v959, 0.0
    %v968 = vmax.f32 %v960, 0.0
    %v969 = vmax.f32 %v961, 0.0
    %v970 = vmax.f32 %v962, 0.0
    %v971 = vmax.f32 %v963, 0.0
    %v972 = vmax.f32 %v964, 0.0
    %v973 = vmax.f32 %v965, 0.0
    %v974 = vmax.f32 %v966, 0.0
    %975 = vst [vmem:[#allocation11] sm:$0xff] %v967
    %976 = vst [vmem:[#allocation11 + $0x8] sm:$0xff] %v968
    %977 = vst [vmem:[#allocation11 + $0x10] sm:$0xff] %v969
    %978 = vst [vmem:[#allocation11 + $0x18] sm:$0xff] %v970
    %979 = vst [vmem:[#allocation11 + $0x20] sm:$0xff] %v971
    %980 = vst [vmem:[#allocation11 + $0x28] sm:$0xff] %v972
    %981 = vst [vmem:[#allocation11 + $0x30] sm:$0xff] %v973
    %982 = vst [vmem:[#allocation11 + $0x38] sm:$0xff] %v974
    // Predicated region
    $region46: #{tpu_custom_call.1} parent=1 // pred_check
      _
    $region47: #{tpu_custom_call.1} parent=1 // pred_check_branch
      %984 = sbr.rel (0) target = $region49
    $region48: #{tpu_custom_call.1} parent=1 // pred_region
      %s986 = ssub.s32 1024, 1024
      %987 = vsyncadd [#allocation4], %s986
      %s988 = sshll.u32 [#allocation11], 4
      %s989 = int_to_ptr.vmem [resolvable:$true] %s988
      %994 = dma.vmem_to_hbm [thread:$0]  %s989, 1024, %s6, [#allocation4], 256, 256, 16
    $region49: #{tpu_custom_call.1} parent=1 // pred_fallthru
      _
    // Predicated region
    $region50: #{tpu_custom_call.1} parent=1 // pred_check
      _
    $region51: #{tpu_custom_call.1} parent=1 // pred_check_branch
      %996 = sbr.rel (0) target = $region53
    $region52: #{tpu_custom_call.1} parent=1 // pred_region
      %997 = dma.done [#allocation4], 1024
    $region53: #{tpu_custom_call.1} parent=1 // pred_fallthru
      _
    %998 = vsyncpa [#allocation3], 1
    %999 = vsyncpa [#allocation6], 1
    %1000 = vsyncpa [#allocation9], 1
    %1001 = vsyncpa [#allocation4], 1

</llo_original>
